<compile_context>
chip_gen: v6e
topology: v6e:2x2x1
jax: 0.10.0
libtpu: 0.0.40
codegen_flags: <defaults>
</compile_context>

<pallas_src>
import jax
import jax.numpy as jnp
from jax import lax
from jax.experimental import pallas as pl
from jax.experimental.pallas import tpu as pltpu

# mode = 1 shapes
IN_SHAPE = 153
OUT_SHAPE = 9 * 10   # 90 (folded away by the BN fusion)
H1 = 128
H2 = 64
BN_EPS = 1e-5
IN_PAD = 256         # 153 -> next multiple of 128 (lane-dense loads/stores)


def _round_up(n, m):
    return (n + m - 1) // m * m


def autoencoder_kernel(
    x_ref,
    w1_ref, b1_ref,     # encode: Linear(in_pad, 128)
    w2_ref, b2_ref,     # encode: Linear(128, 64)
    w34_ref, b34_ref,   # fused:  Linear(64, 90) -> BN(90, eval) -> Linear(90, 64)
    w5_ref, b5_ref,     # decode: Linear(64, 128)
    w6_ref, b6_ref,     # decode: Linear(128, in_pad)
    o_ref,
):
    # All matmuls: bf16 operands, f32 accumulation on the MXU.
    x = x_ref[...].astype(jnp.bfloat16)

    h = jnp.dot(x, w1_ref[...], preferred_element_type=jnp.float32) + b1_ref[...]
    h = jnp.maximum(h, 0.0).astype(jnp.bfloat16)          # ReLU (Dropout = id in eval)

    h = jnp.dot(h, w2_ref[...], preferred_element_type=jnp.float32) + b2_ref[...]
    h = jnp.maximum(h, 0.0).astype(jnp.bfloat16)

    # Fused encode-linear3 / eval-BatchNorm / decode-linear1 (single 64x64 dot)
    h = jnp.dot(h, w34_ref[...], preferred_element_type=jnp.float32) + b34_ref[...]
    h = jnp.maximum(h, 0.0).astype(jnp.bfloat16)

    h = jnp.dot(h, w5_ref[...], preferred_element_type=jnp.float32) + b5_ref[...]
    h = jnp.maximum(h, 0.0).astype(jnp.bfloat16)

    y = jnp.dot(h, w6_ref[...], preferred_element_type=jnp.float32) + b6_ref[...]
    o_ref[...] = y.astype(o_ref.dtype)


def prepare_kernel_params(p):
    """Fold BN into its neighbors, pad the ragged 153 dim to 256, cast to bf16."""
    # Eval BN: zn = z * s + (beta - rmean * s),  s = gamma * rsqrt(rvar + eps)
    s = p["bn_gamma"] * lax.rsqrt(p["bn_rvar"] + BN_EPS)                  # (1, 90)
    w34 = p["w3"] @ (s.reshape(-1, 1) * p["w4"])                          # (64, 64)
    b34 = ((p["b3"] - p["bn_rmean"]) * s + p["bn_beta"]) @ p["w4"] + p["b4"]

    w1 = jnp.zeros((IN_PAD, H1), jnp.float32).at[:IN_SHAPE].set(p["w1"])
    w6 = jnp.zeros((H1, IN_PAD), jnp.float32).at[:, :IN_SHAPE].set(p["w6"])
    b6 = jnp.zeros((1, IN_PAD), jnp.float32).at[:, :IN_SHAPE].set(p["b6"])

    bf = lambda w: w.astype(jnp.bfloat16)
    return (
        bf(w1), p["b1"],
        bf(p["w2"]), p["b2"],
        bf(w34), b34,
        bf(p["w5"]), p["b5"],
        bf(w6), b6,
    )


def autoencoder_forward(x, kernel_params, *, tb=512):
    """x: (B, IN_SHAPE) float32. kernel_params: output of prepare_kernel_params."""
    B = x.shape[0]
    TB = min(tb, _round_up(max(B, 1), 8))        # big batch tile; tiny B stays tiny
    B_pad = _round_up(B, TB)

    x_pad = jnp.zeros((B_pad, IN_PAD), jnp.float32).at[:B, :IN_SHAPE].set(x)

    data_spec = pl.BlockSpec((TB, IN_PAD), lambda i: (i, 0))
    weight_specs = [pl.BlockSpec(w.shape, lambda i: (0, 0)) for w in kernel_params]

    flops = 2 * B_pad * (IN_PAD * H1 + H1 * H2 + H2 * H2 + H2 * H1 + H1 * IN_PAD)
    param_bytes = sum(int(w.size) * w.dtype.itemsize for w in kernel_params)
    bytes_accessed = 2 * B_pad * IN_PAD * 4 + param_bytes

    out = pl.pallas_call(
        autoencoder_kernel,
        out_shape=jax.ShapeDtypeStruct((B_pad, IN_PAD), jnp.float32),
        grid=(B_pad // TB,),
        in_specs=[data_spec] + weight_specs,
        out_specs=data_spec,
        compiler_params=pltpu.CompilerParams(dimension_semantics=("parallel",)),
        cost_estimate=pl.CostEstimate(
            flops=flops, transcendentals=0, bytes_accessed=bytes_accessed),
    )(x_pad, *kernel_params)
    return out[:B, :IN_SHAPE]


def _linear_init(key, fan_in, fan_out):
    """Deterministic init (PyTorch-like uniform bounds), weight stored as (in, out)."""
    kw, kb = jax.random.split(key)
    bound = 1.0 / jnp.sqrt(float(fan_in))
    w = jax.random.uniform(kw, (fan_in, fan_out), jnp.float32, -bound, bound)
    b = jax.random.uniform(kb, (1, fan_out), jnp.float32, -bound, bound)
    return w, b


def init_params(key):
    keys = jax.random.split(key, 6)
    w1, b1 = _linear_init(keys[0], IN_SHAPE, H1)
    w2, b2 = _linear_init(keys[1], H1, H2)
    w3, b3 = _linear_init(keys[2], H2, OUT_SHAPE)
    w4, b4 = _linear_init(keys[3], OUT_SHAPE, H2)
    w5, b5 = _linear_init(keys[4], H2, H1)
    w6, b6 = _linear_init(keys[5], H1, IN_SHAPE)
    return {
        "w1": w1, "b1": b1,
        "w2": w2, "b2": b2,
        "w3": w3, "b3": b3,
        # BatchNorm1d(OUT_SHAPE): gamma=1, beta=0, running_mean=0, running_var=1
        "bn_gamma": jnp.ones((1, OUT_SHAPE), jnp.float32),
        "bn_beta": jnp.zeros((1, OUT_SHAPE), jnp.float32),
        "bn_rmean": jnp.zeros((1, OUT_SHAPE), jnp.float32),
        "bn_rvar": jnp.ones((1, OUT_SHAPE), jnp.float32),
        "w4": w4, "b4": b4,
        "w5": w5, "b5": b5,
        "w6": w6, "b6": b6,
    }


def reference_forward(x, p):
    """Pure-JAX f32 reference of the original (un-fused, un-padded) module."""
    h = jnp.maximum(x @ p["w1"] + p["b1"], 0.0)
    h = jnp.maximum(h @ p["w2"] + p["b2"], 0.0)
    z = h @ p["w3"] + p["b3"]
    zn = (z - p["bn_rmean"]) / jnp.sqrt(p["bn_rvar"] + BN_EPS) * p["bn_gamma"] + p["bn_beta"]
    h = jnp.maximum(zn @ p["w4"] + p["b4"], 0.0)
    h = jnp.maximum(h @ p["w5"] + p["b5"], 0.0)
    return h @ p["w6"] + p["b6"]


if __name__ == "__main__":
    key = jax.random.PRNGKey(0)
    kx, kp, kx2 = jax.random.split(key, 3)

    params = init_params(kp)
    kparams = prepare_kernel_params(params)

    # Small single-tile run (B=8 -> one grid step).
    B = 8
    x = jax.random.normal(kx, (B, IN_SHAPE), jnp.float32)
    out = jax.block_until_ready(autoencoder_forward(x, kparams))
    ref = reference_forward(x, params)
    assert out.shape == (B, IN_SHAPE), out.shape
    err = float(jnp.max(jnp.abs(out - ref)))
    assert jnp.allclose(out, ref, atol=5e-2, rtol=5e-2), err

    # Multi-tile run exercising the batch grid (777 -> padded 1024, 2 tiles of 512).
    B2 = 777
    x2 = jax.random.normal(kx2, (B2, IN_SHAPE), jnp.float32)
    out2 = jax.block_until_ready(autoencoder_forward(x2, kparams))
    ref2 = reference_forward(x2, params)
    assert out2.shape == (B2, IN_SHAPE), out2.shape
    err2 = float(jnp.max(jnp.abs(out2 - ref2)))
    assert jnp.allclose(out2, ref2, atol=5e-2, rtol=5e-2), err2

    print("KERNEL_OK")
</pallas_src>

<mosaic_0001>
module attributes {stable_mosaic.version = 11 : i64} {
  func.func @autoencoder_kernel(%arg0: i32, %arg1: memref<8x256xf32, #tpu.memory_space<vmem>>, %arg2: memref<256x128xbf16, #tpu.memory_space<vmem>>, %arg3: memref<1x128xf32, #tpu.memory_space<vmem>>, %arg4: memref<128x64xbf16, #tpu.memory_space<vmem>>, %arg5: memref<1x64xf32, #tpu.memory_space<vmem>>, %arg6: memref<64x64xbf16, #tpu.memory_space<vmem>>, %arg7: memref<1x64xf32, #tpu.memory_space<vmem>>, %arg8: memref<64x128xbf16, #tpu.memory_space<vmem>>, %arg9: memref<1x128xf32, #tpu.memory_space<vmem>>, %arg10: memref<128x256xbf16, #tpu.memory_space<vmem>>, %arg11: memref<1x256xf32, #tpu.memory_space<vmem>>, %arg12: memref<8x256xf32, #tpu.memory_space<vmem>>) attributes {dimension_semantics = [#tpu.dimension_semantics<parallel>], iteration_bounds = array<i64: 1>, scalar_prefetch = 0 : i64, scratch_operands = 0 : i64, tpu.core_type = #tpu.core_type<tc>, window_params = [{transform_indices = @transform_0, window_bounds = array<i64: 8, 256>}, {pipeline_mode = #tpu.pipeline_mode<synchronous>, transform_indices = @transform_1, window_bounds = array<i64: 256, 128>}, {pipeline_mode = #tpu.pipeline_mode<synchronous>, transform_indices = @transform_2, window_bounds = array<i64: 1, 128>}, {pipeline_mode = #tpu.pipeline_mode<synchronous>, transform_indices = @transform_3, window_bounds = array<i64: 128, 64>}, {pipeline_mode = #tpu.pipeline_mode<synchronous>, transform_indices = @transform_4, window_bounds = array<i64: 1, 64>}, {pipeline_mode = #tpu.pipeline_mode<synchronous>, transform_indices = @transform_5, window_bounds = array<i64: 64, 64>}, {pipeline_mode = #tpu.pipeline_mode<synchronous>, transform_indices = @transform_6, window_bounds = array<i64: 1, 64>}, {pipeline_mode = #tpu.pipeline_mode<synchronous>, transform_indices = @transform_7, window_bounds = array<i64: 64, 128>}, {pipeline_mode = #tpu.pipeline_mode<synchronous>, transform_indices = @transform_8, window_bounds = array<i64: 1, 128>}, {pipeline_mode = #tpu.pipeline_mode<synchronous>, transform_indices = @transform_9, window_bounds = array<i64: 128, 256>}, {pipeline_mode = #tpu.pipeline_mode<synchronous>, transform_indices = @transform_10, window_bounds = array<i64: 1, 256>}, {transform_indices = @transform_11, window_bounds = array<i64: 8, 256>}]} {
    %c0 = arith.constant 0 : index
    %c0_0 = arith.constant 0 : index
    %0 = vector.load %arg1[%c0, %c0_0] : memref<8x256xf32, #tpu.memory_space<vmem>>, vector<8x256xf32>
    %1 = arith.truncf %0 : vector<8x256xf32> to vector<8x256xbf16>
    %c0_1 = arith.constant 0 : index
    %c0_2 = arith.constant 0 : index
    %2 = vector.load %arg2[%c0_1, %c0_2] : memref<256x128xbf16, #tpu.memory_space<vmem>>, vector<256x128xbf16>
    %cst = arith.constant dense<0.000000e+00> : vector<8x128xf32>
    %3 = tpu.matmul %1, %2, %cst {dimension_numbers = #tpu.dot_dimension_numbers<[1], [0], [0], [1], [0, 0, 1, 1], [], []>} : vector<8x256xbf16>, vector<256x128xbf16>, vector<8x128xf32> -> vector<8x128xf32>
    %c0_3 = arith.constant 0 : index
    %c0_4 = arith.constant 0 : index
    %4 = vector.load %arg3[%c0_3, %c0_4] : memref<1x128xf32, #tpu.memory_space<vmem>>, vector<1x128xf32>
    %5 = vector.broadcast %4 : vector<1x128xf32> to vector<8x128xf32>
    %6 = arith.addf %3, %5 : vector<8x128xf32>
    %cst_5 = arith.constant 0.000000e+00 : f32
    %7 = vector.broadcast %cst_5 : f32 to vector<8x128xf32>
    %8 = arith.maximumf %6, %7 : vector<8x128xf32>
    %9 = arith.truncf %8 : vector<8x128xf32> to vector<8x128xbf16>
    %c0_6 = arith.constant 0 : index
    %c0_7 = arith.constant 0 : index
    %10 = vector.load %arg4[%c0_6, %c0_7] : memref<128x64xbf16, #tpu.memory_space<vmem>>, vector<128x64xbf16>
    %cst_8 = arith.constant dense<0.000000e+00> : vector<8x64xf32>
    %11 = tpu.matmul %9, %10, %cst_8 {dimension_numbers = #tpu.dot_dimension_numbers<[1], [0], [0], [1], [0, 0, 1, 1], [], []>} : vector<8x128xbf16>, vector<128x64xbf16>, vector<8x64xf32> -> vector<8x64xf32>
    %c0_9 = arith.constant 0 : index
    %c0_10 = arith.constant 0 : index
    %12 = vector.load %arg5[%c0_9, %c0_10] : memref<1x64xf32, #tpu.memory_space<vmem>>, vector<1x64xf32>
    %13 = vector.broadcast %12 : vector<1x64xf32> to vector<8x64xf32>
    %14 = arith.addf %11, %13 : vector<8x64xf32>
    %cst_11 = arith.constant 0.000000e+00 : f32
    %15 = vector.broadcast %cst_11 : f32 to vector<8x64xf32>
    %16 = arith.maximumf %14, %15 : vector<8x64xf32>
    %17 = arith.truncf %16 : vector<8x64xf32> to vector<8x64xbf16>
    %c0_12 = arith.constant 0 : index
    %c0_13 = arith.constant 0 : index
    %18 = vector.load %arg6[%c0_12, %c0_13] : memref<64x64xbf16, #tpu.memory_space<vmem>>, vector<64x64xbf16>
    %cst_14 = arith.constant dense<0.000000e+00> : vector<8x64xf32>
    %19 = tpu.matmul %17, %18, %cst_14 {dimension_numbers = #tpu.dot_dimension_numbers<[1], [0], [0], [1], [0, 0, 1, 1], [], []>} : vector<8x64xbf16>, vector<64x64xbf16>, vector<8x64xf32> -> vector<8x64xf32>
    %c0_15 = arith.constant 0 : index
    %c0_16 = arith.constant 0 : index
    %20 = vector.load %arg7[%c0_15, %c0_16] : memref<1x64xf32, #tpu.memory_space<vmem>>, vector<1x64xf32>
    %21 = vector.broadcast %20 : vector<1x64xf32> to vector<8x64xf32>
    %22 = arith.addf %19, %21 : vector<8x64xf32>
    %cst_17 = arith.constant 0.000000e+00 : f32
    %23 = vector.broadcast %cst_17 : f32 to vector<8x64xf32>
    %24 = arith.maximumf %22, %23 : vector<8x64xf32>
    %25 = arith.truncf %24 : vector<8x64xf32> to vector<8x64xbf16>
    %c0_18 = arith.constant 0 : index
    %c0_19 = arith.constant 0 : index
    %26 = vector.load %arg8[%c0_18, %c0_19] : memref<64x128xbf16, #tpu.memory_space<vmem>>, vector<64x128xbf16>
    %cst_20 = arith.constant dense<0.000000e+00> : vector<8x128xf32>
    %27 = tpu.matmul %25, %26, %cst_20 {dimension_numbers = #tpu.dot_dimension_numbers<[1], [0], [0], [1], [0, 0, 1, 1], [], []>} : vector<8x64xbf16>, vector<64x128xbf16>, vector<8x128xf32> -> vector<8x128xf32>
    %c0_21 = arith.constant 0 : index
    %c0_22 = arith.constant 0 : index
    %28 = vector.load %arg9[%c0_21, %c0_22] : memref<1x128xf32, #tpu.memory_space<vmem>>, vector<1x128xf32>
    %29 = vector.broadcast %28 : vector<1x128xf32> to vector<8x128xf32>
    %30 = arith.addf %27, %29 : vector<8x128xf32>
    %cst_23 = arith.constant 0.000000e+00 : f32
    %31 = vector.broadcast %cst_23 : f32 to vector<8x128xf32>
    %32 = arith.maximumf %30, %31 : vector<8x128xf32>
    %33 = arith.truncf %32 : vector<8x128xf32> to vector<8x128xbf16>
    %c0_24 = arith.constant 0 : index
    %c0_25 = arith.constant 0 : index
    %34 = vector.load %arg10[%c0_24, %c0_25] : memref<128x256xbf16, #tpu.memory_space<vmem>>, vector<128x256xbf16>
    %cst_26 = arith.constant dense<0.000000e+00> : vector<8x256xf32>
    %35 = tpu.matmul %33, %34, %cst_26 {dimension_numbers = #tpu.dot_dimension_numbers<[1], [0], [0], [1], [0, 0, 1, 1], [], []>} : vector<8x128xbf16>, vector<128x256xbf16>, vector<8x256xf32> -> vector<8x256xf32>
    %c0_27 = arith.constant 0 : index
    %c0_28 = arith.constant 0 : index
    %36 = vector.load %arg11[%c0_27, %c0_28] : memref<1x256xf32, #tpu.memory_space<vmem>>, vector<1x256xf32>
    %37 = vector.broadcast %36 : vector<1x256xf32> to vector<8x256xf32>
    %38 = arith.addf %35, %37 : vector<8x256xf32>
    %c0_29 = arith.constant 0 : index
    %c0_30 = arith.constant 0 : index
    %39 = vector.load %arg12[%c0_29, %c0_30] : memref<8x256xf32, #tpu.memory_space<vmem>>, vector<8x256xf32>
    tpu.vector_store %arg12[%c0_29, %c0_30], %38 {strides = array<i32>} : memref<8x256xf32, #tpu.memory_space<vmem>>, vector<8x256xf32>,
    return
  }
  func.func @transform_0(%arg0: i32) -> (i32, i32) {
    %c0_i32 = arith.constant 0 : i32
    %c0_i32_0 = arith.constant 0 : i32
    return %arg0, %c0_i32 : i32, i32
  }
  func.func @transform_1(%arg0: i32) -> (i32, i32) {
    %c0_i32 = arith.constant 0 : i32
    %c0_i32_0 = arith.constant 0 : i32
    %c0_i32_1 = arith.constant 0 : i32
    return %c0_i32, %c0_i32_0 : i32, i32
  }
  func.func @transform_2(%arg0: i32) -> (i32, i32) {
    %c0_i32 = arith.constant 0 : i32
    %c0_i32_0 = arith.constant 0 : i32
    %c0_i32_1 = arith.constant 0 : i32
    return %c0_i32, %c0_i32_0 : i32, i32
  }
  func.func @transform_3(%arg0: i32) -> (i32, i32) {
    %c0_i32 = arith.constant 0 : i32
    %c0_i32_0 = arith.constant 0 : i32
    %c0_i32_1 = arith.constant 0 : i32
    return %c0_i32, %c0_i32_0 : i32, i32
  }
  func.func @transform_4(%arg0: i32) -> (i32, i32) {
    %c0_i32 = arith.constant 0 : i32
    %c0_i32_0 = arith.constant 0 : i32
    %c0_i32_1 = arith.constant 0 : i32
    return %c0_i32, %c0_i32_0 : i32, i32
  }
  func.func @transform_5(%arg0: i32) -> (i32, i32) {
    %c0_i32 = arith.constant 0 : i32
    %c0_i32_0 = arith.constant 0 : i32
    %c0_i32_1 = arith.constant 0 : i32
    return %c0_i32, %c0_i32_0 : i32, i32
  }
  func.func @transform_6(%arg0: i32) -> (i32, i32) {
    %c0_i32 = arith.constant 0 : i32
    %c0_i32_0 = arith.constant 0 : i32
    %c0_i32_1 = arith.constant 0 : i32
    return %c0_i32, %c0_i32_0 : i32, i32
  }
  func.func @transform_7(%arg0: i32) -> (i32, i32) {
    %c0_i32 = arith.constant 0 : i32
    %c0_i32_0 = arith.constant 0 : i32
    %c0_i32_1 = arith.constant 0 : i32
    return %c0_i32, %c0_i32_0 : i32, i32
  }
  func.func @transform_8(%arg0: i32) -> (i32, i32) {
    %c0_i32 = arith.constant 0 : i32
    %c0_i32_0 = arith.constant 0 : i32
    %c0_i32_1 = arith.constant 0 : i32
    return %c0_i32, %c0_i32_0 : i32, i32
  }
  func.func @transform_9(%arg0: i32) -> (i32, i32) {
    %c0_i32 = arith.constant 0 : i32
    %c0_i32_0 = arith.constant 0 : i32
    %c0_i32_1 = arith.constant 0 : i32
    return %c0_i32, %c0_i32_0 : i32, i32
  }
  func.func @transform_10(%arg0: i32) -> (i32, i32) {
    %c0_i32 = arith.constant 0 : i32
    %c0_i32_0 = arith.constant 0 : i32
    %c0_i32_1 = arith.constant 0 : i32
    return %c0_i32, %c0_i32_0 : i32, i32
  }
  func.func @transform_11(%arg0: i32) -> (i32, i32) {
    %c0_i32 = arith.constant 0 : i32
    %c0_i32_0 = arith.constant 0 : i32
    return %arg0, %c0_i32 : i32, i32
  }
}

</mosaic_0001>

<llo_original>
// kernel: tpu_custom_call.1
$region0: #{tpu_custom_call.1}
  #allocation0 [shape = 'u32[]', space=smem, size = 0x4, offset = 0x4, fixed_abs, tag = 'smem constant byte address 0x4 - core index']
  #allocation1 [shape = 'u32[144,128]{1,0:T(1,128)}', space=vmem, size = 0x12000, scoped, tag = 'internal scratch']
  %s0 = inlined_call_operand.vmem [shape: f32[8,256], index: 0, kind: input, shape index: {}]
  %s1 = inlined_call_operand.hbm [shape: bf16[256,128], index: 1, kind: input, shape index: {}]
  %s2 = inlined_call_operand.vmem [shape: f32[1,128], index: 2, kind: input, shape index: {}]
  %s3 = inlined_call_operand.vmem [shape: bf16[128,64], index: 3, kind: input, shape index: {}]
  %s4 = inlined_call_operand.vmem [shape: f32[1,64], index: 4, kind: input, shape index: {}]
  %s5 = inlined_call_operand.vmem [shape: bf16[64,64], index: 5, kind: input, shape index: {}]
  %s6 = inlined_call_operand.vmem [shape: f32[1,64], index: 6, kind: input, shape index: {}]
  %s7 = inlined_call_operand.vmem [shape: bf16[64,128], index: 7, kind: input, shape index: {}]
  %s8 = inlined_call_operand.vmem [shape: f32[1,128], index: 8, kind: input, shape index: {}]
  %s9 = inlined_call_operand.hbm [shape: bf16[128,256], index: 9, kind: input, shape index: {}]
  %s10 = inlined_call_operand.vmem [shape: f32[1,256], index: 10, kind: input, shape index: {}]
  %s11 = inlined_call_operand.hbm [shape: f32[8,256], index: 11, kind: output, shape index: {}]
  %s12 = sld [smem:[#allocation0]]
  $region62: #{tpu_custom_call.1} parent=0
    _
  %s14 = ssub.s32 1, %s12
  %s15 = scalar_select 0, %s14, %s12
  $region1: #{tpu_custom_call.1} parent=0
    #allocation2 [shape = 'u8[65536]{0}', space=vmem, size = 0x10000, scoped, tag = 'input window, operand 1, single buffered']
    #allocation3 [shape = 's32[1]{0}', space=sflag, size = 0x4, scoped, tag = 'scoped memory for tpu_custom_call.1']
    #allocation4 [shape = 's32[1]{0}', space=sflag, size = 0x4, scoped, tag = 'scoped memory for tpu_custom_call.1']
    #allocation5 [shape = 'u8[65536]{0}', space=vmem, size = 0x10000, scoped, tag = 'input window, operand 9, single buffered']
    #allocation6 [shape = 's32[1]{0}', space=sflag, size = 0x4, scoped, tag = 'scoped memory for tpu_custom_call.1']
    #allocation7 [shape = 'u8[8192]{0}', space=vmem, size = 0x2000, scoped, tag = 'output window, operand 0, single buffered']
    %16 = vsyncpa [#allocation3], 0
    %17 = vsyncpa [#allocation6], 0
    %18 = vsyncpa [#allocation4], 0
    // Predicated region
    $region2: #{tpu_custom_call.1} parent=1 // pred_check
      _
    $region3: #{tpu_custom_call.1} parent=1 // pred_check_branch
      %20 = sbr.rel (0) target = $region5
    $region4: #{tpu_custom_call.1} parent=1 // pred_region
      _
    $region5: #{tpu_custom_call.1} parent=1 // pred_fallthru
      _
    // Predicated region
    $region6: #{tpu_custom_call.1} parent=1 // pred_check
      _
    $region7: #{tpu_custom_call.1} parent=1 // pred_check_branch
      %22 = sbr.rel (0) target = $region9
    $region8: #{tpu_custom_call.1} parent=1 // pred_region
      %s24 = ssub.s32 2048, 2048
      %25 = vsyncadd [#allocation3], %s24
      %s26 = sshll.u32 [#allocation2], 4
      %s27 = int_to_ptr.vmem [resolvable:$true] %s26
      %32 = dma.hbm_to_vmem [thread:$0]  %s1, 2048, %s27, [#allocation3], 64, 64, 4
    $region9: #{tpu_custom_call.1} parent=1 // pred_fallthru
      _
    // Predicated region
    $region10: #{tpu_custom_call.1} parent=1 // pred_check
      _
    $region11: #{tpu_custom_call.1} parent=1 // pred_check_branch
      %34 = sbr.rel (0) target = $region13
    $region12: #{tpu_custom_call.1} parent=1 // pred_region
      _
    $region13: #{tpu_custom_call.1} parent=1 // pred_fallthru
      _
    // Predicated region
    $region14: #{tpu_custom_call.1} parent=1 // pred_check
      _
    $region15: #{tpu_custom_call.1} parent=1 // pred_check_branch
      %36 = sbr.rel (0) target = $region17
    $region16: #{tpu_custom_call.1} parent=1 // pred_region
      _
    $region17: #{tpu_custom_call.1} parent=1 // pred_fallthru
      _
    // Predicated region
    $region18: #{tpu_custom_call.1} parent=1 // pred_check
      _
    $region19: #{tpu_custom_call.1} parent=1 // pred_check_branch
      %38 = sbr.rel (0) target = $region21
    $region20: #{tpu_custom_call.1} parent=1 // pred_region
      _
    $region21: #{tpu_custom_call.1} parent=1 // pred_fallthru
      _
    // Predicated region
    $region22: #{tpu_custom_call.1} parent=1 // pred_check
      _
    $region23: #{tpu_custom_call.1} parent=1 // pred_check_branch
      %40 = sbr.rel (0) target = $region25
    $region24: #{tpu_custom_call.1} parent=1 // pred_region
      _
    $region25: #{tpu_custom_call.1} parent=1 // pred_fallthru
      _
    // Predicated region
    $region26: #{tpu_custom_call.1} parent=1 // pred_check
      _
    $region27: #{tpu_custom_call.1} parent=1 // pred_check_branch
      %42 = sbr.rel (0) target = $region29
    $region28: #{tpu_custom_call.1} parent=1 // pred_region
      _
    $region29: #{tpu_custom_call.1} parent=1 // pred_fallthru
      _
    // Predicated region
    $region30: #{tpu_custom_call.1} parent=1 // pred_check
      _
    $region31: #{tpu_custom_call.1} parent=1 // pred_check_branch
      %44 = sbr.rel (0) target = $region33
    $region32: #{tpu_custom_call.1} parent=1 // pred_region
      _
    $region33: #{tpu_custom_call.1} parent=1 // pred_fallthru
      _
    // Predicated region
    $region34: #{tpu_custom_call.1} parent=1 // pred_check
      _
    $region35: #{tpu_custom_call.1} parent=1 // pred_check_branch
      %46 = sbr.rel (0) target = $region37
    $region36: #{tpu_custom_call.1} parent=1 // pred_region
      _
    $region37: #{tpu_custom_call.1} parent=1 // pred_fallthru
      _
    // Predicated region
    $region38: #{tpu_custom_call.1} parent=1 // pred_check
      _
    $region39: #{tpu_custom_call.1} parent=1 // pred_check_branch
      %48 = sbr.rel (0) target = $region41
    $region40: #{tpu_custom_call.1} parent=1 // pred_region
      %s50 = ssub.s32 2048, 2048
      %51 = vsyncadd [#allocation6], %s50
      %s52 = sshll.u32 [#allocation5], 4
      %s53 = int_to_ptr.vmem [resolvable:$true] %s52
      %58 = dma.hbm_to_vmem [thread:$0]  %s9, 2048, %s53, [#allocation6], 128, 128, 8
    $region41: #{tpu_custom_call.1} parent=1 // pred_fallthru
      _
    // Predicated region
    $region42: #{tpu_custom_call.1} parent=1 // pred_check
      _
    $region43: #{tpu_custom_call.1} parent=1 // pred_check_branch
      %60 = sbr.rel (0) target = $region45
    $region44: #{tpu_custom_call.1} parent=1 // pred_region
      _
    $region45: #{tpu_custom_call.1} parent=1 // pred_fallthru
      _
    // Predicated region
    $region46: #{tpu_custom_call.1} parent=1 // pred_check
      _
    $region47: #{tpu_custom_call.1} parent=1 // pred_check_branch
      %62 = sbr.rel (0) target = $region49
    $region48: #{tpu_custom_call.1} parent=1 // pred_region
      %63 = dma.done [#allocation3], 2048
    $region49: #{tpu_custom_call.1} parent=1 // pred_fallthru
      _
    // Predicated region
    $region50: #{tpu_custom_call.1} parent=1 // pred_check
      _
    $region51: #{tpu_custom_call.1} parent=1 // pred_check_branch
      %65 = sbr.rel (0) target = $region53
    $region52: #{tpu_custom_call.1} parent=1 // pred_region
      %66 = dma.done [#allocation6], 2048
    $region53: #{tpu_custom_call.1} parent=1 // pred_fallthru
      _
    %v68 = vld [vmem:[%s0] sm:$0xff]
    %v69 = vld [vmem:[%s0 + $0x8] sm:$0xff]
    %v70 = vpack.c.bf16 %v68, %v68
    %v71 = vpack.c.bf16 %v69, %v69
    %v72 = vld [vmem:[#allocation2] sm:$0xf]
    %v73 = vld [vmem:[#allocation2 + $0x4] sm:$0xf]
    %v74 = vld [vmem:[#allocation2 + $0x8] sm:$0xf]
    %v75 = vld [vmem:[#allocation2 + $0xc] sm:$0xf]
    %v76 = vld [vmem:[#allocation2 + $0x10] sm:$0xf]
    %v77 = vld [vmem:[#allocation2 + $0x14] sm:$0xf]
    %v78 = vld [vmem:[#allocation2 + $0x18] sm:$0xf]
    %v79 = vld [vmem:[#allocation2 + $0x1c] sm:$0xf]
    %v80 = vld [vmem:[#allocation2 + $0x20] sm:$0xf]
    %v81 = vld [vmem:[#allocation2 + $0x24] sm:$0xf]
    %v82 = vld [vmem:[#allocation2 + $0x28] sm:$0xf]
    %v83 = vld [vmem:[#allocation2 + $0x2c] sm:$0xf]
    %v84 = vld [vmem:[#allocation2 + $0x30] sm:$0xf]
    %v85 = vld [vmem:[#allocation2 + $0x34] sm:$0xf]
    %v86 = vld [vmem:[#allocation2 + $0x38] sm:$0xf]
    %v87 = vld [vmem:[#allocation2 + $0x3c] sm:$0xf]
    %v88 = vld [vmem:[#allocation2 + $0x40] sm:$0xf]
    %v89 = vld [vmem:[#allocation2 + $0x44] sm:$0xf]
    %v90 = vld [vmem:[#allocation2 + $0x48] sm:$0xf]
    %v91 = vld [vmem:[#allocation2 + $0x4c] sm:$0xf]
    %v92 = vld [vmem:[#allocation2 + $0x50] sm:$0xf]
    %v93 = vld [vmem:[#allocation2 + $0x54] sm:$0xf]
    %v94 = vld [vmem:[#allocation2 + $0x58] sm:$0xf]
    %v95 = vld [vmem:[#allocation2 + $0x5c] sm:$0xf]
    %v96 = vld [vmem:[#allocation2 + $0x60] sm:$0xf]
    %v97 = vld [vmem:[#allocation2 + $0x64] sm:$0xf]
    %v98 = vld [vmem:[#allocation2 + $0x68] sm:$0xf]
    %v99 = vld [vmem:[#allocation2 + $0x6c] sm:$0xf]
    %v100 = vld [vmem:[#allocation2 + $0x70] sm:$0xf]
    %v101 = vld [vmem:[#allocation2 + $0x74] sm:$0xf]
    %v102 = vld [vmem:[#allocation2 + $0x78] sm:$0xf]
    %v103 = vld [vmem:[#allocation2 + $0x7c] sm:$0xf]
    %v104 = vld [vmem:[%s2] sm:$0x1]
    %v106 = vlaneseq
    %v107 = vshrl.u32 %v106, 7
    %v108 = vsub.s32 0, %v107
    %v109 = vrot.slane %v104, %v108
    %v143 = vunpack.c.l.b16 %v72
    %v144 = vunpack.c.l.b16 %v73
    %v145 = vunpack.c.l.b16 %v74
    %v146 = vunpack.c.l.b16 %v75
    %v147 = vunpack.c.l.b16 %v76
    %v148 = vunpack.c.l.b16 %v77
    %v149 = vunpack.c.l.b16 %v78
    %v150 = vunpack.c.l.b16 %v79
    %v151 = vunpack.c.l.b16 %v80
    %v152 = vunpack.c.l.b16 %v81
    %v153 = vunpack.c.l.b16 %v82
    %v154 = vunpack.c.l.b16 %v83
    %v155 = vunpack.c.l.b16 %v84
    %v156 = vunpack.c.l.b16 %v85
    %v157 = vunpack.c.l.b16 %v86
    %v158 = vunpack.c.l.b16 %v87
    %v159 = vunpack.c.l.b16 %v88
    %v160 = vunpack.c.l.b16 %v89
    %v161 = vunpack.c.l.b16 %v90
    %v162 = vunpack.c.l.b16 %v91
    %v163 = vunpack.c.l.b16 %v92
    %v164 = vunpack.c.l.b16 %v93
    %v165 = vunpack.c.l.b16 %v94
    %v166 = vunpack.c.l.b16 %v95
    %v167 = vunpack.c.l.b16 %v96
    %v168 = vunpack.c.l.b16 %v97
    %v169 = vunpack.c.l.b16 %v98
    %v170 = vunpack.c.l.b16 %v99
    %v171 = vunpack.c.l.b16 %v100
    %v172 = vunpack.c.l.b16 %v101
    %v173 = vunpack.c.l.b16 %v102
    %v174 = vunpack.c.l.b16 %v103
    %v175 = vpack.c.b16 %v144, %v143
    %v176 = vpack.c.b16 %v146, %v145
    %v177 = vpack.c.b16 %v148, %v147
    %v178 = vpack.c.b16 %v150, %v149
    %v179 = vpack.c.b16 %v152, %v151
    %v180 = vpack.c.b16 %v154, %v153
    %v181 = vpack.c.b16 %v156, %v155
    %v182 = vpack.c.b16 %v158, %v157
    %v183 = vpack.c.b16 %v160, %v159
    %v184 = vpack.c.b16 %v162, %v161
    %v185 = vpack.c.b16 %v164, %v163
    %v186 = vpack.c.b16 %v166, %v165
    %v187 = vpack.c.b16 %v168, %v167
    %v188 = vpack.c.b16 %v170, %v169
    %v189 = vpack.c.b16 %v172, %v171
    %v190 = vpack.c.b16 %v174, %v173
    %207 = vmatprep.subr.bf16.mxu0 0
    %208 = vmatpush1.bf16.msra.mxu0 %v182
    %209 = vmatprep.subr.bf16.mxu0 0
    %210 = vmatpush1.bf16.msra.mxu0 %v181
    %211 = vmatprep.subr.bf16.mxu0 0
    %212 = vmatpush1.bf16.msra.mxu0 %v180
    %213 = vmatprep.subr.bf16.mxu0 0
    %214 = vmatpush1.bf16.msra.mxu0 %v179
    %215 = vmatprep.subr.bf16.mxu0 0
    %216 = vmatpush1.bf16.msra.mxu0 %v178
    %217 = vmatprep.subr.bf16.mxu0 0
    %218 = vmatpush1.bf16.msra.mxu0 %v177
    %219 = vmatprep.subr.bf16.mxu0 0
    %220 = vmatpush1.bf16.msra.mxu0 %v176
    %221 = vmatprep.subr.bf16.mxu0 0
    %222 = vmatpush1.bf16.msra.mxu0 %v175
    %223 = vmatprep.subr.bf16.mxu0 0
    %224 = vmatpush2.bf16.msra.mxu0 %v190
    %225 = vmatprep.subr.bf16.mxu0 0
    %226 = vmatpush2.bf16.msra.mxu0 %v189
    %227 = vmatprep.subr.bf16.mxu0 0
    %228 = vmatpush2.bf16.msra.mxu0 %v188
    %229 = vmatprep.subr.bf16.mxu0 0
    %230 = vmatpush2.bf16.msra.mxu0 %v187
    %231 = vmatprep.subr.bf16.mxu0 0
    %232 = vmatpush2.bf16.msra.mxu0 %v186
    %233 = vmatprep.subr.bf16.mxu0 0
    %234 = vmatpush2.bf16.msra.mxu0 %v185
    %235 = vmatprep.subr.bf16.mxu0 0
    %236 = vmatpush2.bf16.msra.mxu0 %v184
    %237 = vmatprep.subr.bf16.mxu0 0
    %238 = vmatpush2.bf16.msra.mxu0 %v183
    %239 = vmatprep.mubr.bf16.mxu0 %v71
    %240 = vmatmul.mubr.bf16.gmra.mxu0 %v70
    %v241 = vpop.f32.mrf.mxu0
    %v242 = vadd.f32 %v109, %v241
    %v243 = vpop.f32.mrf.mxu0
    %v244 = vpop.f32.mrf.mxu0
    %v245 = vpop.f32.mrf.mxu0
    %246 = vdwg.mxu0
    %v247 = vmax.f32 %v242, 0.0
    %v248 = vpack.c.bf16 %v247, %v247
    %v249 = vld [vmem:[%s3] sm:$0xf]
    %v250 = vld [vmem:[%s3 + $0x4] sm:$0xf]
    %v251 = vld [vmem:[%s3 + $0x8] sm:$0xf]
    %v252 = vld [vmem:[%s3 + $0xc] sm:$0xf]
    %v253 = vld [vmem:[%s3 + $0x10] sm:$0xf]
    %v254 = vld [vmem:[%s3 + $0x14] sm:$0xf]
    %v255 = vld [vmem:[%s3 + $0x18] sm:$0xf]
    %v256 = vld [vmem:[%s3 + $0x1c] sm:$0xf]
    %v257 = vld [vmem:[%s3 + $0x20] sm:$0xf]
    %v258 = vld [vmem:[%s3 + $0x24] sm:$0xf]
    %v259 = vld [vmem:[%s3 + $0x28] sm:$0xf]
    %v260 = vld [vmem:[%s3 + $0x2c] sm:$0xf]
    %v261 = vld [vmem:[%s3 + $0x30] sm:$0xf]
    %v262 = vld [vmem:[%s3 + $0x34] sm:$0xf]
    %v263 = vld [vmem:[%s3 + $0x38] sm:$0xf]
    %v264 = vld [vmem:[%s3 + $0x3c] sm:$0xf]
    %v265 = vld [vmem:[%s4] sm:$0x1]
    %v267 = vlaneseq
    %v268 = vshrl.u32 %v267, 7
    %v269 = vsub.s32 0, %v268
    %v270 = vrot.slane %v265, %v269
    %v288 = vunpack.c.l.b16 %v249
    %v289 = vunpack.c.l.b16 %v250
    %v290 = vunpack.c.l.b16 %v251
    %v291 = vunpack.c.l.b16 %v252
    %v292 = vunpack.c.l.b16 %v253
    %v293 = vunpack.c.l.b16 %v254
    %v294 = vunpack.c.l.b16 %v255
    %v295 = vunpack.c.l.b16 %v256
    %v296 = vunpack.c.l.b16 %v257
    %v297 = vunpack.c.l.b16 %v258
    %v298 = vunpack.c.l.b16 %v259
    %v299 = vunpack.c.l.b16 %v260
    %v300 = vunpack.c.l.b16 %v261
    %v301 = vunpack.c.l.b16 %v262
    %v302 = vunpack.c.l.b16 %v263
    %v303 = vunpack.c.l.b16 %v264
    %v304 = vpack.c.b16 %v289, %v288
    %v305 = vpack.c.b16 %v291, %v290
    %v306 = vpack.c.b16 %v293, %v292
    %v307 = vpack.c.b16 %v295, %v294
    %v308 = vpack.c.b16 %v297, %v296
    %v309 = vpack.c.b16 %v299, %v298
    %v310 = vpack.c.b16 %v301, %v300
    %v311 = vpack.c.b16 %v303, %v302
    %320 = vmatprep.subr.bf16.mxu0 0
    %321 = vmatpush1.bf16.msra.mxu0 %v311
    %322 = vmatprep.subr.bf16.mxu0 0
    %323 = vmatpush1.bf16.msra.mxu0 %v310
    %324 = vmatprep.subr.bf16.mxu0 0
    %325 = vmatpush1.bf16.msra.mxu0 %v309
    %326 = vmatprep.subr.bf16.mxu0 0
    %327 = vmatpush1.bf16.msra.mxu0 %v308
    %328 = vmatprep.subr.bf16.mxu0 0
    %329 = vmatpush1.bf16.msra.mxu0 %v307
    %330 = vmatprep.subr.bf16.mxu0 0
    %331 = vmatpush1.bf16.msra.mxu0 %v306
    %332 = vmatprep.subr.bf16.mxu0 0
    %333 = vmatpush1.bf16.msra.mxu0 %v305
    %334 = vmatprep.subr.bf16.mxu0 0
    %335 = vmatpush1.bf16.msra.mxu0 %v304
    %336 = vmatprep.subr.bf16.mxu0 0
    %337 = vmatpush2.bf16.msra.mxu0 0
    %338 = vmatprep.subr.bf16.mxu0 0
    %339 = vmatpush2.bf16.msra.mxu0 0
    %340 = vmatprep.subr.bf16.mxu0 0
    %341 = vmatpush2.bf16.msra.mxu0 0
    %342 = vmatprep.subr.bf16.mxu0 0
    %343 = vmatpush2.bf16.msra.mxu0 0
    %344 = vmatprep.subr.bf16.mxu0 0
    %345 = vmatpush2.bf16.msra.mxu0 0
    %346 = vmatprep.subr.bf16.mxu0 0
    %347 = vmatpush2.bf16.msra.mxu0 0
    %348 = vmatprep.subr.bf16.mxu0 0
    %349 = vmatpush2.bf16.msra.mxu0 0
    %350 = vmatprep.subr.bf16.mxu0 0
    %351 = vmatpush2.bf16.msra.mxu0 0
    %352 = vmatprep.mubr.bf16.mxu0 0
    %353 = vmatmul.mubr.bf16.gmra.mxu0 %v248
    %v354 = vpop.f32.mrf.mxu0
    %v355 = vadd.f32 %v270, %v354
    %v356 = vpop.f32.mrf.mxu0
    %v357 = vpop.f32.mrf.mxu0
    %v358 = vpop.f32.mrf.mxu0
    %359 = vdwg.mxu0
    %v360 = vmax.f32 %v355, 0.0
    %v361 = vpack.c.bf16 %v360, %v360
    %v362 = vld [vmem:[%s5] sm:$0xf]
    %v363 = vld [vmem:[%s5 + $0x4] sm:$0xf]
    %v364 = vld [vmem:[%s5 + $0x8] sm:$0xf]
    %v365 = vld [vmem:[%s5 + $0xc] sm:$0xf]
    %v366 = vld [vmem:[%s5 + $0x10] sm:$0xf]
    %v367 = vld [vmem:[%s5 + $0x14] sm:$0xf]
    %v368 = vld [vmem:[%s5 + $0x18] sm:$0xf]
    %v369 = vld [vmem:[%s5 + $0x1c] sm:$0xf]
    %v370 = vld [vmem:[%s6] sm:$0x1]
    %v372 = vlaneseq
    %v373 = vshrl.u32 %v372, 7
    %v374 = vsub.s32 0, %v373
    %v375 = vrot.slane %v370, %v374
    %v385 = vunpack.c.l.b16 %v362
    %v386 = vunpack.c.l.b16 %v363
    %v387 = vunpack.c.l.b16 %v364
    %v388 = vunpack.c.l.b16 %v365
    %v389 = vunpack.c.l.b16 %v366
    %v390 = vunpack.c.l.b16 %v367
    %v391 = vunpack.c.l.b16 %v368
    %v392 = vunpack.c.l.b16 %v369
    %v393 = vpack.c.b16 %v386, %v385
    %v394 = vpack.c.b16 %v388, %v387
    %v395 = vpack.c.b16 %v390, %v389
    %v396 = vpack.c.b16 %v392, %v391
    %vm401 = vcmask 523264
    %v403 = vsel %vm401, %v361, 0
    %405 = vmatprep.subr.bf16.mxu0 0
    %406 = vmatpush1.bf16.msra.mxu0 0
    %407 = vmatprep.subr.bf16.mxu0 0
    %408 = vmatpush1.bf16.msra.mxu0 0
    %409 = vmatprep.subr.bf16.mxu0 0
    %410 = vmatpush1.bf16.msra.mxu0 0
    %411 = vmatprep.subr.bf16.mxu0 0
    %412 = vmatpush1.bf16.msra.mxu0 0
    %413 = vmatprep.subr.bf16.mxu0 0
    %414 = vmatpush1.bf16.msra.mxu0 %v396
    %415 = vmatprep.subr.bf16.mxu0 0
    %416 = vmatpush1.bf16.msra.mxu0 %v395
    %417 = vmatprep.subr.bf16.mxu0 0
    %418 = vmatpush1.bf16.msra.mxu0 %v394
    %419 = vmatprep.subr.bf16.mxu0 0
    %420 = vmatpush1.bf16.msra.mxu0 %v393
    %421 = vmatprep.subr.bf16.mxu0 0
    %422 = vmatpush2.bf16.msra.mxu0 0
    %423 = vmatprep.subr.bf16.mxu0 0
    %424 = vmatpush2.bf16.msra.mxu0 0
    %425 = vmatprep.subr.bf16.mxu0 0
    %426 = vmatpush2.bf16.msra.mxu0 0
    %427 = vmatprep.subr.bf16.mxu0 0
    %428 = vmatpush2.bf16.msra.mxu0 0
    %429 = vmatprep.subr.bf16.mxu0 0
    %430 = vmatpush2.bf16.msra.mxu0 0
    %431 = vmatprep.subr.bf16.mxu0 0
    %432 = vmatpush2.bf16.msra.mxu0 0
    %433 = vmatprep.subr.bf16.mxu0 0
    %434 = vmatpush2.bf16.msra.mxu0 0
    %435 = vmatprep.subr.bf16.mxu0 0
    %436 = vmatpush2.bf16.msra.mxu0 0
    %437 = vmatprep.mubr.bf16.mxu0 0
    %438 = vmatmul.mubr.bf16.gmra.mxu0 %v403
    %v439 = vpop.f32.mrf.mxu0
    %v440 = vadd.f32 %v375, %v439
    %v441 = vpop.f32.mrf.mxu0
    %v442 = vpop.f32.mrf.mxu0
    %v443 = vpop.f32.mrf.mxu0
    %444 = vdwg.mxu0
    %v445 = vmax.f32 %v440, 0.0
    %v446 = vpack.c.bf16 %v445, %v445
    %v447 = vld [vmem:[%s7] sm:$0xf]
    %v448 = vld [vmem:[%s7 + $0x4] sm:$0xf]
    %v449 = vld [vmem:[%s7 + $0x8] sm:$0xf]
    %v450 = vld [vmem:[%s7 + $0xc] sm:$0xf]
    %v451 = vld [vmem:[%s7 + $0x10] sm:$0xf]
    %v452 = vld [vmem:[%s7 + $0x14] sm:$0xf]
    %v453 = vld [vmem:[%s7 + $0x18] sm:$0xf]
    %v454 = vld [vmem:[%s7 + $0x1c] sm:$0xf]
    %v455 = vld [vmem:[%s8] sm:$0x1]
    %v457 = vlaneseq
    %v458 = vshrl.u32 %v457, 7
    %v459 = vsub.s32 0, %v458
    %v460 = vrot.slane %v455, %v459
    %v470 = vunpack.c.l.b16 %v447
    %v471 = vunpack.c.l.b16 %v448
    %v472 = vunpack.c.l.b16 %v449
    %v473 = vunpack.c.l.b16 %v450
    %v474 = vunpack.c.l.b16 %v451
    %v475 = vunpack.c.l.b16 %v452
    %v476 = vunpack.c.l.b16 %v453
    %v477 = vunpack.c.l.b16 %v454
    %v478 = vpack.c.b16 %v471, %v470
    %v479 = vpack.c.b16 %v473, %v472
    %v480 = vpack.c.b16 %v475, %v474
    %v481 = vpack.c.b16 %v477, %v476
    %v487 = vsel %vm401, %v446, 0
    %489 = vmatprep.subr.bf16.mxu0 0
    %490 = vmatpush1.bf16.msra.mxu0 0
    %491 = vmatprep.subr.bf16.mxu0 0
    %492 = vmatpush1.bf16.msra.mxu0 0
    %493 = vmatprep.subr.bf16.mxu0 0
    %494 = vmatpush1.bf16.msra.mxu0 0
    %495 = vmatprep.subr.bf16.mxu0 0
    %496 = vmatpush1.bf16.msra.mxu0 0
    %497 = vmatprep.subr.bf16.mxu0 0
    %498 = vmatpush1.bf16.msra.mxu0 %v481
    %499 = vmatprep.subr.bf16.mxu0 0
    %500 = vmatpush1.bf16.msra.mxu0 %v480
    %501 = vmatprep.subr.bf16.mxu0 0
    %502 = vmatpush1.bf16.msra.mxu0 %v479
    %503 = vmatprep.subr.bf16.mxu0 0
    %504 = vmatpush1.bf16.msra.mxu0 %v478
    %505 = vmatprep.subr.bf16.mxu0 0
    %506 = vmatpush2.bf16.msra.mxu0 0
    %507 = vmatprep.subr.bf16.mxu0 0
    %508 = vmatpush2.bf16.msra.mxu0 0
    %509 = vmatprep.subr.bf16.mxu0 0
    %510 = vmatpush2.bf16.msra.mxu0 0
    %511 = vmatprep.subr.bf16.mxu0 0
    %512 = vmatpush2.bf16.msra.mxu0 0
    %513 = vmatprep.subr.bf16.mxu0 0
    %514 = vmatpush2.bf16.msra.mxu0 0
    %515 = vmatprep.subr.bf16.mxu0 0
    %516 = vmatpush2.bf16.msra.mxu0 0
    %517 = vmatprep.subr.bf16.mxu0 0
    %518 = vmatpush2.bf16.msra.mxu0 0
    %519 = vmatprep.subr.bf16.mxu0 0
    %520 = vmatpush2.bf16.msra.mxu0 0
    %521 = vmatprep.mubr.bf16.mxu0 0
    %522 = vmatmul.mubr.bf16.gmra.mxu0 %v487
    %v523 = vpop.f32.mrf.mxu0
    %v524 = vadd.f32 %v460, %v523
    %v525 = vpop.f32.mrf.mxu0
    %v526 = vpop.f32.mrf.mxu0
    %v527 = vpop.f32.mrf.mxu0
    %528 = vdwg.mxu0
    %v529 = vmax.f32 %v524, 0.0
    %v530 = vpack.c.bf16 %v529, %v529
    %v531 = vld [vmem:[#allocation5] sm:$0xff]
    %v532 = vld [vmem:[#allocation5 + $0x8] sm:$0xff]
    %v533 = vld [vmem:[#allocation5 + $0x10] sm:$0xff]
    %v534 = vld [vmem:[#allocation5 + $0x18] sm:$0xff]
    %v535 = vld [vmem:[#allocation5 + $0x20] sm:$0xff]
    %v536 = vld [vmem:[#allocation5 + $0x28] sm:$0xff]
    %v537 = vld [vmem:[#allocation5 + $0x30] sm:$0xff]
    %v538 = vld [vmem:[#allocation5 + $0x38] sm:$0xff]
    %v539 = vld [vmem:[#allocation5 + $0x40] sm:$0xff]
    %v540 = vld [vmem:[#allocation5 + $0x48] sm:$0xff]
    %v541 = vld [vmem:[#allocation5 + $0x50] sm:$0xff]
    %v542 = vld [vmem:[#allocation5 + $0x58] sm:$0xff]
    %v543 = vld [vmem:[#allocation5 + $0x60] sm:$0xff]
    %v544 = vld [vmem:[#allocation5 + $0x68] sm:$0xff]
    %v545 = vld [vmem:[#allocation5 + $0x70] sm:$0xff]
    %v546 = vld [vmem:[#allocation5 + $0x78] sm:$0xff]
    %v547 = vld [vmem:[%s10] sm:$0x3]
    %v549 = vlaneseq
    %v550 = vshrl.u32 %v549, 7
    %v551 = vsub.s32 0, %v550
    %v552 = vrot.slane %v547, %v551
    %v553 = vlaneseq
    %v554 = vshrl.u32 %v553, 7
    %v555 = vsub.s32 1, %v554
    %v556 = vrot.slane %v547, %v555
    %v575 = vunpack.c.l.b16 %v531
    %v576 = vunpack.c.h.b16 %v531
    %v577 = vunpack.c.l.b16 %v532
    %v578 = vunpack.c.h.b16 %v532
    %v579 = vunpack.c.l.b16 %v533
    %v580 = vunpack.c.h.b16 %v533
    %v581 = vunpack.c.l.b16 %v534
    %v582 = vunpack.c.h.b16 %v534
    %v583 = vunpack.c.l.b16 %v535
    %v584 = vunpack.c.h.b16 %v535
    %v585 = vunpack.c.l.b16 %v536
    %v586 = vunpack.c.h.b16 %v536
    %v587 = vunpack.c.l.b16 %v537
    %v588 = vunpack.c.h.b16 %v537
    %v589 = vunpack.c.l.b16 %v538
    %v590 = vunpack.c.h.b16 %v538
    %v591 = vunpack.c.l.b16 %v539
    %v592 = vunpack.c.h.b16 %v539
    %v593 = vunpack.c.l.b16 %v540
    %v594 = vunpack.c.h.b16 %v540
    %v595 = vunpack.c.l.b16 %v541
    %v596 = vunpack.c.h.b16 %v541
    %v597 = vunpack.c.l.b16 %v542
    %v598 = vunpack.c.h.b16 %v542
    %v599 = vunpack.c.l.b16 %v543
    %v600 = vunpack.c.h.b16 %v543
    %v601 = vunpack.c.l.b16 %v544
    %v602 = vunpack.c.h.b16 %v544
    %v603 = vunpack.c.l.b16 %v545
    %v604 = vunpack.c.h.b16 %v545
    %v605 = vunpack.c.l.b16 %v546
    %v606 = vunpack.c.h.b16 %v546
    %v607 = vpack.c.b16 %v577, %v575
    %v608 = vpack.c.b16 %v578, %v576
    %v609 = vpack.c.b16 %v581, %v579
    %v610 = vpack.c.b16 %v582, %v580
    %v611 = vpack.c.b16 %v585, %v583
    %v612 = vpack.c.b16 %v586, %v584
    %v613 = vpack.c.b16 %v589, %v587
    %v614 = vpack.c.b16 %v590, %v588
    %v615 = vpack.c.b16 %v593, %v591
    %v616 = vpack.c.b16 %v594, %v592
    %v617 = vpack.c.b16 %v597, %v595
    %v618 = vpack.c.b16 %v598, %v596
    %v619 = vpack.c.b16 %v601, %v599
    %v620 = vpack.c.b16 %v602, %v600
    %v621 = vpack.c.b16 %v605, %v603
    %v622 = vpack.c.b16 %v606, %v604
    %639 = vmatprep.subr.bf16.mxu0 %v622
    %640 = vmatpush1.bf16.msra.mxu0 %v621
    %641 = vmatprep.subr.bf16.mxu0 %v620
    %642 = vmatpush1.bf16.msra.mxu0 %v619
    %643 = vmatprep.subr.bf16.mxu0 %v618
    %644 = vmatpush1.bf16.msra.mxu0 %v617
    %645 = vmatprep.subr.bf16.mxu0 %v616
    %646 = vmatpush1.bf16.msra.mxu0 %v615
    %647 = vmatprep.subr.bf16.mxu0 %v614
    %648 = vmatpush1.bf16.msra.mxu0 %v613
    %649 = vmatprep.subr.bf16.mxu0 %v612
    %650 = vmatpush1.bf16.msra.mxu0 %v611
    %651 = vmatprep.subr.bf16.mxu0 %v610
    %652 = vmatpush1.bf16.msra.mxu0 %v609
    %653 = vmatprep.subr.bf16.mxu0 %v608
    %654 = vmatpush1.bf16.msra.mxu0 %v607
    %655 = vmatprep.subr.bf16.mxu0 0
    %656 = vmatpush2.bf16.msra.mxu0 0
    %657 = vmatprep.subr.bf16.mxu0 0
    %658 = vmatpush2.bf16.msra.mxu0 0
    %659 = vmatprep.subr.bf16.mxu0 0
    %660 = vmatpush2.bf16.msra.mxu0 0
    %661 = vmatprep.subr.bf16.mxu0 0
    %662 = vmatpush2.bf16.msra.mxu0 0
    %663 = vmatprep.subr.bf16.mxu0 0
    %664 = vmatpush2.bf16.msra.mxu0 0
    %665 = vmatprep.subr.bf16.mxu0 0
    %666 = vmatpush2.bf16.msra.mxu0 0
    %667 = vmatprep.subr.bf16.mxu0 0
    %668 = vmatpush2.bf16.msra.mxu0 0
    %669 = vmatprep.subr.bf16.mxu0 0
    %670 = vmatpush2.bf16.msra.mxu0 0
    %671 = vmatprep.mubr.bf16.mxu0 0
    %672 = vmatmul.mubr.bf16.gmra.mxu0 %v530
    %v673 = vpop.f32.mrf.mxu0
    %v674 = vadd.f32 %v552, %v673
    %v675 = vpop.f32.mrf.mxu0
    %v676 = vadd.f32 %v556, %v675
    %v677 = vpop.f32.mrf.mxu0
    %v678 = vpop.f32.mrf.mxu0
    %679 = vdwg.mxu0
    %680 = vst [vmem:[#allocation7] sm:$0xff] %v674
    %681 = vst [vmem:[#allocation7 + $0x8] sm:$0xff] %v676
    // Predicated region
    $region54: #{tpu_custom_call.1} parent=1 // pred_check
      _
    $region55: #{tpu_custom_call.1} parent=1 // pred_check_branch
      %683 = sbr.rel (0) target = $region57
    $region56: #{tpu_custom_call.1} parent=1 // pred_region
      %s685 = ssub.s32 256, 256
      %686 = vsyncadd [#allocation4], %s685
      %s688 = sshll.u32 [#allocation7], 4
      %s689 = int_to_ptr.vmem [resolvable:$true] %s688
      %691 = dma.vmem_to_hbm [thread:$0]  %s689, 256, %s11, [#allocation4]
    $region57: #{tpu_custom_call.1} parent=1 // pred_fallthru
      _
    // Predicated region
    $region58: #{tpu_custom_call.1} parent=1 // pred_check
      _
    $region59: #{tpu_custom_call.1} parent=1 // pred_check_branch
      %693 = sbr.rel (0) target = $region61
    $region60: #{tpu_custom_call.1} parent=1 // pred_region
      %694 = dma.done [#allocation4], 256
    $region61: #{tpu_custom_call.1} parent=1 // pred_fallthru
      _
    %695 = vsyncpa [#allocation3], 1
    %696 = vsyncpa [#allocation6], 1
    %697 = vsyncpa [#allocation4], 1

</llo_original>
